<compile_context>
chip_gen: v5e
topology: v5e:2x2
jax: 0.10.0
libtpu: 0.0.40
codegen_flags: <defaults>
</compile_context>

<pallas_src>
import jax
import jax.numpy as jnp
from jax import lax
from jax.experimental import pallas as pl
from jax.experimental.pallas import tpu as pltpu


def _round_up(x: int, m: int) -> int:
    return ((x + m - 1) // m) * m


# ---------------------------------------------------------------------------
# Kernel bodies. x_ref: (tm, tk), w_ref: (tk, tn)  -> MXU-native jnp.dot.
# "direct" variants accumulate straight into the f32 output block (no scratch).
# ---------------------------------------------------------------------------
def _mm_kernel_direct(x_ref, w_ref, o_ref):
    @pl.when(pl.program_id(2) == 0)
    def _():
        o_ref[...] = jnp.zeros_like(o_ref)

    o_ref[...] += jnp.dot(x_ref[...], w_ref[...],
                          preferred_element_type=jnp.float32)


def _mm_bias_kernel_direct(x_ref, w_ref, b_ref, o_ref):
    k = pl.program_id(2)

    @pl.when(k == 0)
    def _():
        o_ref[...] = jnp.zeros_like(o_ref)

    o_ref[...] += jnp.dot(x_ref[...], w_ref[...],
                          preferred_element_type=jnp.float32)

    @pl.when(k == pl.num_programs(2) - 1)
    def _():
        # Bias added exactly once, in f32, in the finalize branch.
        o_ref[...] += b_ref[...]


def _mm_kernel_acc(x_ref, w_ref, o_ref, acc_ref):
    k = pl.program_id(2)

    @pl.when(k == 0)
    def _():
        acc_ref[...] = jnp.zeros_like(acc_ref)

    acc_ref[...] += jnp.dot(x_ref[...], w_ref[...],
                            preferred_element_type=jnp.float32)

    @pl.when(k == pl.num_programs(2) - 1)
    def _():
        o_ref[...] = acc_ref[...].astype(o_ref.dtype)


def _mm_bias_kernel_acc(x_ref, w_ref, b_ref, o_ref, acc_ref):
    k = pl.program_id(2)

    @pl.when(k == 0)
    def _():
        acc_ref[...] = jnp.zeros_like(acc_ref)

    acc_ref[...] += jnp.dot(x_ref[...], w_ref[...],
                            preferred_element_type=jnp.float32)

    @pl.when(k == pl.num_programs(2) - 1)
    def _():
        o_ref[...] = (acc_ref[...] + b_ref[...]).astype(o_ref.dtype)


def column_parallel_linear(x, w_shard, b_shard=None, *,
                           tm=512, tn=512, tk=1024,
                           compute_dtype=jnp.bfloat16):
    """y = x @ w_shard.T + b_shard, matching F.linear semantics.

    x:        (..., K)
    w_shard:  (N_shard, K)   -- PyTorch nn.Linear weight layout (NOT transposed)
    b_shard:  (N_shard,) or None
    compute_dtype: dtype fed to the MXU (accumulation is always f32).
                   None -> keep x's dtype (exact f32 path for f32 inputs).
    returns:  (..., N_shard) with x's dtype.
    """
    K = x.shape[-1]
    N = w_shard.shape[0]
    assert w_shard.shape[1] == K

    lead_shape = x.shape[:-1]
    M = 1
    for d in lead_shape:
        M *= d

    out_dtype = x.dtype
    if M == 0:  # empty leading dims -> no grid; just return an empty result.
        return jnp.zeros((*lead_shape, N), dtype=out_dtype)

    cdt = jnp.dtype(out_dtype) if compute_dtype is None else jnp.dtype(compute_dtype)

    x2d = x.reshape(M, K).astype(cdt)
    # One transpose+cast+pad pass over the (static) weight: gives the MXU its
    # native (K, N) RHS layout so no per-step in-kernel transpose is needed.
    w2d = w_shard.T.astype(cdt)                       # (K, N)

    # Clamp tile sizes to the (padded) problem; keep sublane/lane alignment.
    tm = min(tm, _round_up(M, 16))     # 16: bf16 sublane packing (also fine for f32)
    tn = min(tn, _round_up(N, 128))    # lane-dense output stores
    tk = min(tk, _round_up(K, 128))
    M_pad = _round_up(M, tm)
    N_pad = _round_up(N, tn)
    K_pad = _round_up(K, tk)

    if (M_pad, K_pad) != (M, K):
        x2d = jnp.pad(x2d, ((0, M_pad - M), (0, K_pad - K)))
    if (K_pad, N_pad) != (K, N):
        w2d = jnp.pad(w2d, ((0, K_pad - K), (0, N_pad - N)))

    grid_m, grid_n, grid_k = M_pad // tm, N_pad // tn, K_pad // tk

    # Put the grid axis with the most tiles first so v7x's two TensorCores both
    # get work (M is often a single tile in decode).  K stays last ("arbitrary").
    if grid_m >= grid_n:
        grid = (grid_m, grid_n, grid_k)
        x_spec = pl.BlockSpec((tm, tk), lambda i, j, k: (i, k))
        w_spec = pl.BlockSpec((tk, tn), lambda i, j, k: (k, j))
        o_spec = pl.BlockSpec((tm, tn), lambda i, j, k: (i, j))
        b_spec = pl.BlockSpec((1, tn), lambda i, j, k: (0, j))
    else:
        grid = (grid_n, grid_m, grid_k)
        x_spec = pl.BlockSpec((tm, tk), lambda j, i, k: (i, k))
        w_spec = pl.BlockSpec((tk, tn), lambda j, i, k: (k, j))
        o_spec = pl.BlockSpec((tm, tn), lambda j, i, k: (i, j))
        b_spec = pl.BlockSpec((1, tn), lambda j, i, k: (0, j))

    # f32 output blocks stay resident across K -> accumulate directly, no scratch.
    direct_out = jnp.dtype(out_dtype) == jnp.float32
    scratch = [] if direct_out else [pltpu.VMEM((tm, tn), jnp.float32)]

    # VMEM budget: double-buffered input/output tiles (+ accumulator), with
    # headroom, capped at 48 MiB so the same setting is safe on v7x (64 MiB).
    csz = cdt.itemsize
    osz = jnp.dtype(out_dtype).itemsize
    dbuf = 2 * (tm * tk * csz + tk * tn * csz + tm * tn * osz)
    if b_shard is not None:
        dbuf += 2 * tn * 4
    acc_bytes = 0 if direct_out else tm * tn * 4
    vmem_limit = min(max(32 * 1024 * 1024, 2 * (dbuf + acc_bytes)),
                     48 * 1024 * 1024)

    compiler_params = pltpu.CompilerParams(
        dimension_semantics=("parallel", "parallel", "arbitrary"),
        vmem_limit_bytes=vmem_limit,
    )

    # Real streamed bytes: X is re-read per N-tile, W re-read per M-tile.
    cost = pl.CostEstimate(
        flops=2 * M_pad * K_pad * N_pad,
        transcendentals=0,
        bytes_accessed=(grid_n * x2d.size * x2d.dtype.itemsize
                        + grid_m * w2d.size * w2d.dtype.itemsize
                        + M_pad * N_pad * osz))

    if b_shard is None:
        kernel = _mm_kernel_direct if direct_out else _mm_kernel_acc
        out2d = pl.pallas_call(
            kernel,
            out_shape=jax.ShapeDtypeStruct((M_pad, N_pad), out_dtype),
            grid_spec=pltpu.PrefetchScalarGridSpec(
                num_scalar_prefetch=0,
                grid=grid,
                in_specs=[x_spec, w_spec],
                out_specs=o_spec,
                scratch_shapes=scratch),
            compiler_params=compiler_params,
            cost_estimate=cost,
        )(x2d, w2d)
    else:
        b2d = b_shard.reshape(1, N).astype(jnp.float32)   # added in f32
        if N_pad != N:
            b2d = jnp.pad(b2d, ((0, 0), (0, N_pad - N)))
        kernel = _mm_bias_kernel_direct if direct_out else _mm_bias_kernel_acc
        out2d = pl.pallas_call(
            kernel,
            out_shape=jax.ShapeDtypeStruct((M_pad, N_pad), out_dtype),
            grid_spec=pltpu.PrefetchScalarGridSpec(
                num_scalar_prefetch=0,
                grid=grid,
                in_specs=[x_spec, w_spec, b_spec],
                out_specs=o_spec,
                scratch_shapes=scratch),
            compiler_params=compiler_params,
            cost_estimate=cost,
        )(x2d, w2d, b2d)

    out2d = out2d[:M, :N]
    return out2d.reshape(*lead_shape, N)


if __name__ == "__main__":
    key = jax.random.PRNGKey(0)
    k_x, k_w, k_b = jax.random.split(key, 3)

    # Small, forward-consistent shapes.
    batch, seq = 2, 8
    in_features = 32
    out_features = 64
    world_size = 2
    rank = 0

    # Deterministic "full" nn.Linear parameters, then shard like the module does.
    w_full = jax.random.normal(k_w, (out_features, in_features), dtype=jnp.float32) * 0.05
    b_full = jax.random.normal(k_b, (out_features,), dtype=jnp.float32) * 0.05
    n_shard = out_features // world_size
    w_shard = w_full[rank * n_shard:(rank + 1) * n_shard, :]   # chunk(dim=0)[rank]
    b_shard = b_full[rank * n_shard:(rank + 1) * n_shard]

    x = jax.random.normal(k_x, (batch, seq, in_features), dtype=jnp.float32)

    # --- default path: bf16 MXU operands, f32 accumulation, with bias ---------
    y = jax.block_until_ready(column_parallel_linear(x, w_shard, b_shard))
    assert y.shape == (batch, seq, n_shard), y.shape

    x_bf = x.astype(jnp.bfloat16).astype(jnp.float32)
    w_bf = w_shard.astype(jnp.bfloat16).astype(jnp.float32)
    y_ref_bf = jnp.einsum("bsk,nk->bsn", x_bf, w_bf,
                          precision=lax.Precision.HIGHEST) + b_shard
    assert jnp.allclose(y, y_ref_bf, atol=2e-3, rtol=2e-3)

    y_ref_f32 = jnp.einsum("bsk,nk->bsn", x, w_shard,
                           precision=lax.Precision.HIGHEST) + b_shard
    assert jnp.allclose(y, y_ref_f32, atol=5e-2, rtol=5e-2)

    # --- exact f32 path (no cast), no bias ------------------------------------
    y_nb = jax.block_until_ready(
        column_parallel_linear(x, w_shard, None, compute_dtype=None))
    y_nb_ref = jnp.einsum("bsk,nk->bsn", x, w_shard,
                          precision=lax.Precision.HIGHEST)
    assert jnp.allclose(y_nb, y_nb_ref, atol=1e-4, rtol=1e-4)

    print("KERNEL_OK")
</pallas_src>

<mosaic_0001>
module attributes {stable_mosaic.version = 11 : i64} {
  func.func @_mm_bias_kernel_direct(%arg0: i32, %arg1: i32, %arg2: i32, %arg3: memref<16x128xbf16, #tpu.memory_space<vmem>>, %arg4: memref<128x128xbf16, #tpu.memory_space<vmem>>, %arg5: memref<1x128xf32, #tpu.memory_space<vmem>>, %arg6: memref<16x128xf32, #tpu.memory_space<vmem>>) attributes {dimension_semantics = [#tpu.dimension_semantics<parallel>, #tpu.dimension_semantics<parallel>, #tpu.dimension_semantics<arbitrary>], iteration_bounds = array<i64: 1, 1, 1>, scalar_prefetch = 0 : i64, scratch_operands = 0 : i64, tpu.core_type = #tpu.core_type<tc>, window_params = [{transform_indices = @transform_0, window_bounds = array<i64: 16, 128>}, {transform_indices = @transform_1, window_bounds = array<i64: 128, 128>}, {transform_indices = @transform_2, window_bounds = array<i64: 1, 128>}, {transform_indices = @transform_3, window_bounds = array<i64: 16, 128>}]} {
    %c0_i32 = arith.constant 0 : i32
    %0 = arith.cmpi eq, %arg2, %c0_i32 : i32
    %1 = arith.extui %0 : i1 to i32
    %c0_i32_0 = arith.constant 0 : i32
    %2 = arith.cmpi ne, %1, %c0_i32_0 : i32
    scf.if %2 {
      %cst_10 = arith.constant 0.000000e+00 : f32
      %12 = vector.broadcast %cst_10 : f32 to vector<16x128xf32>
      %c0_11 = arith.constant 0 : index
      %c0_12 = arith.constant 0 : index
      %13 = vector.load %arg6[%c0_11, %c0_12] : memref<16x128xf32, #tpu.memory_space<vmem>>, vector<16x128xf32>
      tpu.vector_store %arg6[%c0_11, %c0_12], %12 {strides = array<i32>} : memref<16x128xf32, #tpu.memory_space<vmem>>, vector<16x128xf32>,
    } else {
    }
    %c0 = arith.constant 0 : index
    %c0_1 = arith.constant 0 : index
    %3 = vector.load %arg6[%c0, %c0_1] : memref<16x128xf32, #tpu.memory_space<vmem>>, vector<16x128xf32>
    %c0_2 = arith.constant 0 : index
    %c0_3 = arith.constant 0 : index
    %4 = vector.load %arg3[%c0_2, %c0_3] : memref<16x128xbf16, #tpu.memory_space<vmem>>, vector<16x128xbf16>
    %c0_4 = arith.constant 0 : index
    %c0_5 = arith.constant 0 : index
    %5 = vector.load %arg4[%c0_4, %c0_5] : memref<128x128xbf16, #tpu.memory_space<vmem>>, vector<128x128xbf16>
    %cst = arith.constant dense<0.000000e+00> : vector<16x128xf32>
    %6 = tpu.matmul %4, %5, %cst {dimension_numbers = #tpu.dot_dimension_numbers<[1], [0], [0], [1], [0, 0, 1, 1], [], []>} : vector<16x128xbf16>, vector<128x128xbf16>, vector<16x128xf32> -> vector<16x128xf32>
    %7 = arith.addf %3, %6 : vector<16x128xf32>
    %c0_6 = arith.constant 0 : index
    %c0_7 = arith.constant 0 : index
    %8 = vector.load %arg6[%c0_6, %c0_7] : memref<16x128xf32, #tpu.memory_space<vmem>>, vector<16x128xf32>
    tpu.vector_store %arg6[%c0_6, %c0_7], %7 {strides = array<i32>} : memref<16x128xf32, #tpu.memory_space<vmem>>, vector<16x128xf32>,
    %c0_i32_8 = arith.constant 0 : i32
    %9 = arith.cmpi eq, %arg2, %c0_i32_8 : i32
    %10 = arith.extui %9 : i1 to i32
    %c0_i32_9 = arith.constant 0 : i32
    %11 = arith.cmpi ne, %10, %c0_i32_9 : i32
    scf.if %11 {
      %c0_10 = arith.constant 0 : index
      %c0_11 = arith.constant 0 : index
      %12 = vector.load %arg6[%c0_10, %c0_11] : memref<16x128xf32, #tpu.memory_space<vmem>>, vector<16x128xf32>
      %c0_12 = arith.constant 0 : index
      %c0_13 = arith.constant 0 : index
      %13 = vector.load %arg5[%c0_12, %c0_13] : memref<1x128xf32, #tpu.memory_space<vmem>>, vector<1x128xf32>
      %14 = vector.broadcast %13 : vector<1x128xf32> to vector<16x128xf32>
      %15 = arith.addf %12, %14 : vector<16x128xf32>
      %c0_14 = arith.constant 0 : index
      %c0_15 = arith.constant 0 : index
      %16 = vector.load %arg6[%c0_14, %c0_15] : memref<16x128xf32, #tpu.memory_space<vmem>>, vector<16x128xf32>
      tpu.vector_store %arg6[%c0_14, %c0_15], %15 {strides = array<i32>} : memref<16x128xf32, #tpu.memory_space<vmem>>, vector<16x128xf32>,
    } else {
    }
    return
  }
  func.func @transform_0(%arg0: i32, %arg1: i32, %arg2: i32) -> (i32, i32) {
    %c0_i32 = arith.constant 0 : i32
    return %arg0, %arg2 : i32, i32
  }
  func.func @transform_1(%arg0: i32, %arg1: i32, %arg2: i32) -> (i32, i32) {
    %c0_i32 = arith.constant 0 : i32
    return %arg2, %arg1 : i32, i32
  }
  func.func @transform_2(%arg0: i32, %arg1: i32, %arg2: i32) -> (i32, i32) {
    %c0_i32 = arith.constant 0 : i32
    %c0_i32_0 = arith.constant 0 : i32
    return %c0_i32, %arg1 : i32, i32
  }
  func.func @transform_3(%arg0: i32, %arg1: i32, %arg2: i32) -> (i32, i32) {
    %c0_i32 = arith.constant 0 : i32
    return %arg0, %arg1 : i32, i32
  }
}

</mosaic_0001>

<llo_original>
// kernel: tpu_custom_call.1
$region0: #{tpu_custom_call.1}
  #allocation0 [shape = 'u32[]', space=smem, size = 0x4, offset = 0x4, fixed_abs, tag = 'smem constant byte address 0x4 - core index']
  #allocation1 [shape = 'u32[72,128]{1,0:T(1,128)}', space=vmem, size = 0x9000, scoped, tag = 'internal scratch']
  %s0 = inlined_call_operand.hbm [shape: bf16[16,128], index: 0, kind: input, shape index: {}]
  %s1 = inlined_call_operand.hbm [shape: bf16[128,128], index: 1, kind: input, shape index: {}]
  %s2 = inlined_call_operand.vmem [shape: f32[1,128], index: 2, kind: input, shape index: {}]
  %s3 = inlined_call_operand.hbm [shape: f32[16,128], index: 3, kind: output, shape index: {}]
  %s4 = sld [smem:[#allocation0]]
  $region38: #{tpu_custom_call.1} parent=0
    _
  %s6 = ssub.s32 1, %s4
  %s7 = scalar_select 0, %s6, %s4
  $region1: #{tpu_custom_call.1} parent=0
    #allocation2 [shape = 'u8[4096]{0}', space=vmem, size = 0x1000, scoped, tag = 'input window, operand 0, single buffered']
    #allocation3 [shape = 's32[1]{0}', space=sflag, size = 0x4, scoped, tag = 'scoped memory for tpu_custom_call.1']
    #allocation4 [shape = 's32[1]{0}', space=sflag, size = 0x4, scoped, tag = 'scoped memory for tpu_custom_call.1']
    #allocation5 [shape = 'u8[32768]{0}', space=vmem, size = 0x8000, scoped, tag = 'input window, operand 1, single buffered']
    #allocation6 [shape = 's32[1]{0}', space=sflag, size = 0x4, scoped, tag = 'scoped memory for tpu_custom_call.1']
    #allocation7 [shape = 'u8[8192]{0}', space=vmem, size = 0x2000, scoped, tag = 'output window, operand 0, single buffered']
    %8 = vsyncpa [#allocation3], 0
    %9 = vsyncpa [#allocation6], 0
    %10 = vsyncpa [#allocation4], 0
    // Predicated region
    $region2: #{tpu_custom_call.1} parent=1 // pred_check
      _
    $region3: #{tpu_custom_call.1} parent=1 // pred_check_branch
      %12 = sbr.rel (0) target = $region5
    $region4: #{tpu_custom_call.1} parent=1 // pred_region
      %14 = vsyncadd [#allocation3], 0
      %s15 = sshll.u32 %s0, 4
      %s16 = int_to_ptr.hbm [resolvable:$true] %s15
      %s17 = sshll.u32 [#allocation2], 4
      %s18 = int_to_ptr.vmem [resolvable:$true] %s17
      %23 = dma.hbm_to_vmem [thread:$0]  %s16, 128, %s18, [#allocation3], 64, 64, 4
    $region5: #{tpu_custom_call.1} parent=1 // pred_fallthru
      _
    // Predicated region
    $region6: #{tpu_custom_call.1} parent=1 // pred_check
      _
    $region7: #{tpu_custom_call.1} parent=1 // pred_check_branch
      %25 = sbr.rel (0) target = $region9
    $region8: #{tpu_custom_call.1} parent=1 // pred_region
      %27 = vsyncadd [#allocation6], 0
      %s28 = sshll.u32 %s1, 4
      %s29 = int_to_ptr.hbm [resolvable:$true] %s28
      %s30 = sshll.u32 [#allocation5], 4
      %s31 = int_to_ptr.vmem [resolvable:$true] %s30
      %36 = dma.hbm_to_vmem [thread:$0]  %s29, 1024, %s31, [#allocation6], 64, 64, 4
    $region9: #{tpu_custom_call.1} parent=1 // pred_fallthru
      _
    // Predicated region
    $region10: #{tpu_custom_call.1} parent=1 // pred_check
      _
    $region11: #{tpu_custom_call.1} parent=1 // pred_check_branch
      %38 = sbr.rel (0) target = $region13
    $region12: #{tpu_custom_call.1} parent=1 // pred_region
      _
    $region13: #{tpu_custom_call.1} parent=1 // pred_fallthru
      _
    // Predicated region
    $region14: #{tpu_custom_call.1} parent=1 // pred_check
      _
    $region15: #{tpu_custom_call.1} parent=1 // pred_check_branch
      %40 = sbr.rel (0) target = $region17
    $region16: #{tpu_custom_call.1} parent=1 // pred_region
      %42 = dma.done [#allocation3], 128
    $region17: #{tpu_custom_call.1} parent=1 // pred_fallthru
      _
    // Predicated region
    $region18: #{tpu_custom_call.1} parent=1 // pred_check
      _
    $region19: #{tpu_custom_call.1} parent=1 // pred_check_branch
      %44 = sbr.rel (0) target = $region21
    $region20: #{tpu_custom_call.1} parent=1 // pred_region
      %46 = dma.done [#allocation6], 1024
    $region21: #{tpu_custom_call.1} parent=1 // pred_fallthru
      _
    %p47 = scmp.eq.s32.totalorder 0, 0
    // Predicated region
    $region22: #{tpu_custom_call.1} parent=1 // pred_check
      %p48 = pneg %p47
    $region23: #{tpu_custom_call.1} parent=1 // pred_check_branch
      %50 = sbr.rel (%p48) target = $region25
    $region24: #{tpu_custom_call.1} parent=1 // pred_region
      %51 = vst [vmem:[#allocation7] sm:$0xff] 0.0
      %52 = vst [vmem:[#allocation7 + $0x8] sm:$0xff] 0.0
    $region25: #{tpu_custom_call.1} parent=1 // pred_fallthru
      _
    %v53 = vld [vmem:[#allocation7] sm:$0xff]
    %v54 = vld [vmem:[#allocation7 + $0x8] sm:$0xff]
    %v55 = vld [vmem:[#allocation2] sm:$0xf]
    %v56 = vld [vmem:[#allocation2 + $0x4] sm:$0xf]
    %v57 = vld [vmem:[#allocation5] sm:$0xf]
    %v58 = vld [vmem:[#allocation5 + $0x4] sm:$0xf]
    %v59 = vld [vmem:[#allocation5 + $0x8] sm:$0xf]
    %v60 = vld [vmem:[#allocation5 + $0xc] sm:$0xf]
    %v61 = vld [vmem:[#allocation5 + $0x10] sm:$0xf]
    %v62 = vld [vmem:[#allocation5 + $0x14] sm:$0xf]
    %v63 = vld [vmem:[#allocation5 + $0x18] sm:$0xf]
    %v64 = vld [vmem:[#allocation5 + $0x1c] sm:$0xf]
    %v65 = vld [vmem:[#allocation5 + $0x20] sm:$0xf]
    %v66 = vld [vmem:[#allocation5 + $0x24] sm:$0xf]
    %v67 = vld [vmem:[#allocation5 + $0x28] sm:$0xf]
    %v68 = vld [vmem:[#allocation5 + $0x2c] sm:$0xf]
    %v69 = vld [vmem:[#allocation5 + $0x30] sm:$0xf]
    %v70 = vld [vmem:[#allocation5 + $0x34] sm:$0xf]
    %v71 = vld [vmem:[#allocation5 + $0x38] sm:$0xf]
    %v72 = vld [vmem:[#allocation5 + $0x3c] sm:$0xf]
    %v75 = vunpack.c.l.b16 %v55
    %v76 = vunpack.c.l.b16 %v56
    %v77 = vpack.c.b16 %v76, %v75
    %v95 = vunpack.c.l.b16 %v57
    %v96 = vunpack.c.l.b16 %v58
    %v97 = vunpack.c.l.b16 %v59
    %v98 = vunpack.c.l.b16 %v60
    %v99 = vunpack.c.l.b16 %v61
    %v100 = vunpack.c.l.b16 %v62
    %v101 = vunpack.c.l.b16 %v63
    %v102 = vunpack.c.l.b16 %v64
    %v103 = vunpack.c.l.b16 %v65
    %v104 = vunpack.c.l.b16 %v66
    %v105 = vunpack.c.l.b16 %v67
    %v106 = vunpack.c.l.b16 %v68
    %v107 = vunpack.c.l.b16 %v69
    %v108 = vunpack.c.l.b16 %v70
    %v109 = vunpack.c.l.b16 %v71
    %v110 = vunpack.c.l.b16 %v72
    %v111 = vpack.c.b16 %v96, %v95
    %v112 = vpack.c.b16 %v98, %v97
    %v113 = vpack.c.b16 %v100, %v99
    %v114 = vpack.c.b16 %v102, %v101
    %v115 = vpack.c.b16 %v104, %v103
    %v116 = vpack.c.b16 %v106, %v105
    %v117 = vpack.c.b16 %v108, %v107
    %v118 = vpack.c.b16 %v110, %v109
    %127 = vmatpush.bf16.msra.mxu0 %v118
    %128 = vmatpush.bf16.msra.mxu0 %v117
    %129 = vmatpush.bf16.msra.mxu0 %v116
    %130 = vmatpush.bf16.msra.mxu0 %v115
    %131 = vmatpush.bf16.msra.mxu0 %v114
    %132 = vmatpush.bf16.msra.mxu0 %v113
    %133 = vmatpush.bf16.msra.mxu0 %v112
    %134 = vmatpush.bf16.msra.mxu0 %v111
    %135 = vmatmul.bf16.gmra.mxu0 %v77
    %v136 = vpop.f32.mrf.mxu0
    %v137 = vadd.f32 0.0, %v136
    %v138 = vpop.f32.mrf.mxu0
    %v139 = vadd.f32 0.0, %v138
    %140 = vdwg.mxu0
    %v141 = vadd.f32 %v53, %v137
    %v142 = vadd.f32 %v54, %v139
    %143 = vst [vmem:[#allocation7] sm:$0xff] %v141
    %144 = vst [vmem:[#allocation7 + $0x8] sm:$0xff] %v142
    // Predicated region
    $region26: #{tpu_custom_call.1} parent=1 // pred_check
      %p145 = pneg %p47
    $region27: #{tpu_custom_call.1} parent=1 // pred_check_branch
      %147 = sbr.rel (%p145) target = $region29
    $region28: #{tpu_custom_call.1} parent=1 // pred_region
      %v148 = vld [vmem:[#allocation7] sm:$0xff]
      %v149 = vld [vmem:[#allocation7 + $0x8] sm:$0xff]
      %v150 = vld [vmem:[%s2] sm:$0x1]
      %v152 = vperm.slane %v150, 0
      %v154 = vadd.f32 %v148, %v152
      %v155 = vadd.f32 %v149, %v152
      %156 = vst [vmem:[#allocation7] sm:$0xff] %v154
      %157 = vst [vmem:[#allocation7 + $0x8] sm:$0xff] %v155
    $region29: #{tpu_custom_call.1} parent=1 // pred_fallthru
      _
    // Predicated region
    $region30: #{tpu_custom_call.1} parent=1 // pred_check
      _
    $region31: #{tpu_custom_call.1} parent=1 // pred_check_branch
      %159 = sbr.rel (0) target = $region33
    $region32: #{tpu_custom_call.1} parent=1 // pred_region
      %161 = vsyncadd [#allocation4], 0
      %s162 = sshll.u32 [#allocation7], 4
      %s163 = int_to_ptr.vmem [resolvable:$true] %s162
      %s164 = sshll.u32 %s3, 4
      %s165 = int_to_ptr.hbm [resolvable:$true] %s164
      %170 = dma.vmem_to_hbm [thread:$0]  %s163, 256, %s165, [#allocation4], 128, 128, 8
    $region33: #{tpu_custom_call.1} parent=1 // pred_fallthru
      _
    // Predicated region
    $region34: #{tpu_custom_call.1} parent=1 // pred_check
      _
    $region35: #{tpu_custom_call.1} parent=1 // pred_check_branch
      %172 = sbr.rel (0) target = $region37
    $region36: #{tpu_custom_call.1} parent=1 // pred_region
      %174 = dma.done [#allocation4], 256
    $region37: #{tpu_custom_call.1} parent=1 // pred_fallthru
      _
    %175 = vsyncpa [#allocation3], 1
    %176 = vsyncpa [#allocation6], 1
    %177 = vsyncpa [#allocation4], 1

</llo_original>
